<compile_context>
chip_gen: v5e
topology: v5e:2x2
jax: 0.10.0
libtpu: 0.0.40
codegen_flags: <defaults>
</compile_context>

<pallas_src>
import functools

import jax
import jax.numpy as jnp
from jax.experimental import pallas as pl
from jax.experimental.pallas import tpu as pltpu


def ae_kernel(x_ref, we_ref, be_ref, wd_ref, bd_ref, out_ref):
    # ----- encode: z = relu(x @ W_e + b_e) -----
    # x/we are bf16; accumulate on the MXU in f32.
    z = jnp.dot(x_ref[...], we_ref[...], preferred_element_type=jnp.float32)
    z = jnp.maximum(z + be_ref[...], 0.0)        # f32 bias-add + ReLU (VPU)
    # ----- decode: y = z @ W_d + b_d -----
    zq = z.astype(wd_ref.dtype)                  # bf16 operand for MXU
    y = jnp.dot(zq, wd_ref[...], preferred_element_type=jnp.float32)
    out_ref[...] = (y + bd_ref[...]).astype(out_ref.dtype)


@functools.partial(jax.jit, static_argnames=("tb",))
def ae_forward(x, w_enc, b_enc, w_dec, b_dec, *, tb=128):
    """Fused AE forward: relu(x @ W_e + b_e) @ W_d + b_d.

    x:      [B, D]   (any float dtype; matmuls run in bf16, accumulate f32)
    w_enc:  [D, H], b_enc: [H]
    w_dec:  [H, D], b_dec: [D]
    returns [B, D] float32
    """
    B, D = x.shape
    H = w_enc.shape[1]
    assert w_enc.shape == (D, H)
    assert w_dec.shape == (H, D)
    assert D % 128 == 0 and H % 128 == 0, "feature dims must be lane-aligned"

    # Matmul operands in bf16 (MXU fast path on v6e/v7x); biases stay f32.
    x_mm = x.astype(jnp.bfloat16)
    we = w_enc.astype(jnp.bfloat16)
    wd = w_dec.astype(jnp.bfloat16)
    be = b_enc.reshape(1, H).astype(jnp.float32)
    bd = b_dec.reshape(1, D).astype(jnp.float32)

    # Pad batch up to a multiple of the tile so every grid step is full.
    tb = min(tb, max(8, B))
    n_tiles = pl.cdiv(B, tb)
    B_pad = n_tiles * tb
    if B_pad != B:
        x_mm = jnp.pad(x_mm, ((0, B_pad - B), (0, 0)))

    flops = 2 * B_pad * D * H * 2  # two matmuls
    bytes_accessed = (
        x_mm.size * 2 + we.size * 2 + wd.size * 2
        + be.size * 4 + bd.size * 4 + B_pad * D * 4
    )
    cost = pl.CostEstimate(flops=flops, transcendentals=0,
                           bytes_accessed=bytes_accessed)

    out = pl.pallas_call(
        ae_kernel,
        out_shape=jax.ShapeDtypeStruct((B_pad, D), jnp.float32),
        grid=(n_tiles,),
        in_specs=[
            # Streamed activation tile.
            pl.BlockSpec((tb, D), lambda i: (i, 0)),
            # Weights / biases: constant index_map -> VMEM-resident, DMA'd once.
            pl.BlockSpec((D, H), lambda i: (0, 0)),
            pl.BlockSpec((1, H), lambda i: (0, 0)),
            pl.BlockSpec((H, D), lambda i: (0, 0)),
            pl.BlockSpec((1, D), lambda i: (0, 0)),
        ],
        out_specs=pl.BlockSpec((tb, D), lambda i: (i, 0)),
        compiler_params=pltpu.CompilerParams(
            dimension_semantics=("parallel",),   # megacore sharding on v7x
            vmem_limit_bytes=64 << 20,
        ),
        cost_estimate=cost,
    )(x_mm, we, be, wd, bd)

    return out[:B] if B_pad != B else out


def reference_forward(x, w_enc, b_enc, w_dec, b_dec):
    # Mirrors the kernel's mixed-precision scheme (bf16 operands, f32 math)
    # so the tolerance check is tight.
    xf = x.astype(jnp.bfloat16).astype(jnp.float32)
    we = w_enc.astype(jnp.bfloat16).astype(jnp.float32)
    wd = w_dec.astype(jnp.bfloat16).astype(jnp.float32)
    z = jnp.maximum(xf @ we + b_enc, 0.0)
    zq = z.astype(jnp.bfloat16).astype(jnp.float32)
    return zq @ wd + b_dec


if __name__ == "__main__":
    # Batch raised to 256 so the kernel runs 2 pipelined 128-row tiles
    # (M=128 feeds the MXU; grid of 2 exercises batch tiling / megacore).
    B, D, H = 256, 256, 128

    key = jax.random.PRNGKey(0)
    kx, kwe, kbe, kwd, kbd = jax.random.split(key, 5)

    x = jax.random.normal(kx, (B, D), dtype=jnp.float32)
    # Deterministic "Linear" parameter init (uniform, like torch default scale).
    w_enc = jax.random.uniform(kwe, (D, H), jnp.float32, -1.0, 1.0) / jnp.sqrt(D)
    b_enc = jax.random.uniform(kbe, (H,), jnp.float32, -1.0, 1.0) / jnp.sqrt(D)
    w_dec = jax.random.uniform(kwd, (H, D), jnp.float32, -1.0, 1.0) / jnp.sqrt(H)
    b_dec = jax.random.uniform(kbd, (D,), jnp.float32, -1.0, 1.0) / jnp.sqrt(H)

    out = ae_forward(x, w_enc, b_enc, w_dec, b_dec)
    out = jax.block_until_ready(out)

    ref = reference_forward(x, w_enc, b_enc, w_dec, b_dec)
    assert out.shape == (B, D)
    assert out.dtype == jnp.float32
    assert jnp.allclose(out, ref, atol=1e-2, rtol=1e-2), "mismatch vs JAX reference"

    print("KERNEL_OK")
</pallas_src>

<mosaic_0001>
module attributes {stable_mosaic.version = 11 : i64} {
  func.func @ae_kernel(%arg0: i32, %arg1: memref<128x256xbf16, #tpu.memory_space<vmem>>, %arg2: memref<256x128xbf16, #tpu.memory_space<vmem>>, %arg3: memref<1x128xf32, #tpu.memory_space<vmem>>, %arg4: memref<128x256xbf16, #tpu.memory_space<vmem>>, %arg5: memref<1x256xf32, #tpu.memory_space<vmem>>, %arg6: memref<128x256xf32, #tpu.memory_space<vmem>>) attributes {dimension_semantics = [#tpu.dimension_semantics<parallel>], iteration_bounds = array<i64: 2>, scalar_prefetch = 0 : i64, scratch_operands = 0 : i64, tpu.core_type = #tpu.core_type<tc>, window_params = [{transform_indices = @transform_0, window_bounds = array<i64: 128, 256>}, {pipeline_mode = #tpu.pipeline_mode<synchronous>, transform_indices = @transform_1, window_bounds = array<i64: 256, 128>}, {pipeline_mode = #tpu.pipeline_mode<synchronous>, transform_indices = @transform_2, window_bounds = array<i64: 1, 128>}, {pipeline_mode = #tpu.pipeline_mode<synchronous>, transform_indices = @transform_3, window_bounds = array<i64: 128, 256>}, {pipeline_mode = #tpu.pipeline_mode<synchronous>, transform_indices = @transform_4, window_bounds = array<i64: 1, 256>}, {transform_indices = @transform_5, window_bounds = array<i64: 128, 256>}]} {
    %c0 = arith.constant 0 : index
    %c0_0 = arith.constant 0 : index
    %0 = vector.load %arg1[%c0, %c0_0] : memref<128x256xbf16, #tpu.memory_space<vmem>>, vector<128x256xbf16>
    %c0_1 = arith.constant 0 : index
    %c0_2 = arith.constant 0 : index
    %1 = vector.load %arg2[%c0_1, %c0_2] : memref<256x128xbf16, #tpu.memory_space<vmem>>, vector<256x128xbf16>
    %cst = arith.constant dense<0.000000e+00> : vector<128x128xf32>
    %2 = tpu.matmul %0, %1, %cst {dimension_numbers = #tpu.dot_dimension_numbers<[1], [0], [0], [1], [0, 0, 1, 1], [], []>} : vector<128x256xbf16>, vector<256x128xbf16>, vector<128x128xf32> -> vector<128x128xf32>
    %c0_3 = arith.constant 0 : index
    %c0_4 = arith.constant 0 : index
    %3 = vector.load %arg3[%c0_3, %c0_4] : memref<1x128xf32, #tpu.memory_space<vmem>>, vector<1x128xf32>
    %4 = vector.broadcast %3 : vector<1x128xf32> to vector<128x128xf32>
    %5 = arith.addf %2, %4 : vector<128x128xf32>
    %cst_5 = arith.constant 0.000000e+00 : f32
    %6 = vector.broadcast %cst_5 : f32 to vector<128x128xf32>
    %7 = arith.maximumf %5, %6 : vector<128x128xf32>
    %8 = arith.truncf %7 : vector<128x128xf32> to vector<128x128xbf16>
    %c0_6 = arith.constant 0 : index
    %c0_7 = arith.constant 0 : index
    %9 = vector.load %arg4[%c0_6, %c0_7] : memref<128x256xbf16, #tpu.memory_space<vmem>>, vector<128x256xbf16>
    %cst_8 = arith.constant dense<0.000000e+00> : vector<128x256xf32>
    %10 = tpu.matmul %8, %9, %cst_8 {dimension_numbers = #tpu.dot_dimension_numbers<[1], [0], [0], [1], [0, 0, 1, 1], [], []>} : vector<128x128xbf16>, vector<128x256xbf16>, vector<128x256xf32> -> vector<128x256xf32>
    %c0_9 = arith.constant 0 : index
    %c0_10 = arith.constant 0 : index
    %11 = vector.load %arg5[%c0_9, %c0_10] : memref<1x256xf32, #tpu.memory_space<vmem>>, vector<1x256xf32>
    %12 = vector.broadcast %11 : vector<1x256xf32> to vector<128x256xf32>
    %13 = arith.addf %10, %12 : vector<128x256xf32>
    %c0_11 = arith.constant 0 : index
    %c0_12 = arith.constant 0 : index
    %14 = vector.load %arg6[%c0_11, %c0_12] : memref<128x256xf32, #tpu.memory_space<vmem>>, vector<128x256xf32>
    tpu.vector_store %arg6[%c0_11, %c0_12], %13 {strides = array<i32>} : memref<128x256xf32, #tpu.memory_space<vmem>>, vector<128x256xf32>,
    return
  }
  func.func @transform_0(%arg0: i32) -> (i32, i32) {
    %c0_i32 = arith.constant 0 : i32
    %c0_i32_0 = arith.constant 0 : i32
    return %arg0, %c0_i32 : i32, i32
  }
  func.func @transform_1(%arg0: i32) -> (i32, i32) {
    %c0_i32 = arith.constant 0 : i32
    %c0_i32_0 = arith.constant 0 : i32
    %c0_i32_1 = arith.constant 0 : i32
    return %c0_i32, %c0_i32_0 : i32, i32
  }
  func.func @transform_2(%arg0: i32) -> (i32, i32) {
    %c0_i32 = arith.constant 0 : i32
    %c0_i32_0 = arith.constant 0 : i32
    %c0_i32_1 = arith.constant 0 : i32
    return %c0_i32, %c0_i32_0 : i32, i32
  }
  func.func @transform_3(%arg0: i32) -> (i32, i32) {
    %c0_i32 = arith.constant 0 : i32
    %c0_i32_0 = arith.constant 0 : i32
    %c0_i32_1 = arith.constant 0 : i32
    return %c0_i32, %c0_i32_0 : i32, i32
  }
  func.func @transform_4(%arg0: i32) -> (i32, i32) {
    %c0_i32 = arith.constant 0 : i32
    %c0_i32_0 = arith.constant 0 : i32
    %c0_i32_1 = arith.constant 0 : i32
    return %c0_i32, %c0_i32_0 : i32, i32
  }
  func.func @transform_5(%arg0: i32) -> (i32, i32) {
    %c0_i32 = arith.constant 0 : i32
    %c0_i32_0 = arith.constant 0 : i32
    return %arg0, %c0_i32 : i32, i32
  }
}

</mosaic_0001>

<llo_original>
// kernel: ae_forward.1
$region0: #{ae_forward.1}
  #allocation0 [shape = 'u32[]', space=smem, size = 0x4, offset = 0x4, fixed_abs, tag = 'smem constant byte address 0x4 - core index']
  #allocation1 [shape = 'u32[72,128]{1,0:T(1,128)}', space=vmem, size = 0x9000, scoped, tag = 'internal scratch']
  %s0 = inlined_call_operand.vmem [shape: bf16[256,256], index: 0, kind: input, shape index: {}]
  %s1 = inlined_call_operand.vmem [shape: bf16[256,128], index: 1, kind: input, shape index: {}]
  %s2 = inlined_call_operand.vmem [shape: f32[1,128], index: 2, kind: input, shape index: {}]
  %s3 = inlined_call_operand.vmem [shape: bf16[128,256], index: 3, kind: input, shape index: {}]
  %s4 = inlined_call_operand.vmem [shape: f32[1,256], index: 4, kind: input, shape index: {}]
  %s5 = inlined_call_operand.hbm [shape: f32[256,256], index: 5, kind: output, shape index: {}]
  %s6 = sld [smem:[#allocation0]]
  $region53: #{ae_forward.1} parent=0
    _
  %s8 = ssub.s32 1, %s6
  %s9 = scalar_select 0, %s8, %s6
  $region1: #{ae_forward.1} parent=0
    #allocation2 [shape = 'u8[262144]{0}', space=vmem, size = 0x40000, scoped, tag = 'output window, operand 0']
    #allocation3 [shape = 's32[2]{0}', space=sflag, size = 0x8, scoped, tag = 'scoped memory for ae_forward.1']
    %10 = vsyncpa [#allocation3], 0
    %s11 = scalar_lea.sflag [#allocation3], 1
    %12 = vsyncpa %s11, 0
    loop: start=0, step=1, limit=4
    $region2: #{ae_forward.1} parent=1 // loop_pre_header
      _
    $region3: #{ae_forward.1} parent=1 // loop_header
      %s14 = sphi 0, %s18
      %p15 = scmp.ge.s32.totalorder %s14, 4
      %s24 = sphi 0, %s26
      %s27 = sphi 0, %s24
      %s28 = sphi 0, %s27
      %s44 = sphi 0, %s28
      %s48 = sphi 0, %s48
      %s50 = sphi 0, %s48
      %s51 = sphi 0, %s50
      %s65 = sphi 0, %s51
      %s69 = sphi 0, %s69
      %s71 = sphi 0, %s69
      %s72 = sphi 0, %s71
      %s86 = sphi 0, %s72
      %s90 = sphi 0, %s90
      %s92 = sphi 0, %s90
      %s93 = sphi 0, %s92
      %s107 = sphi 0, %s93
      %s111 = sphi 0, %s111
      %s113 = sphi 0, %s111
      %s114 = sphi 0, %s113
      %s128 = sphi 0, %s114
      %s134 = sphi 0, %s136
      %s137 = sphi 0, %s134
      %s138 = sphi 0, %s137
      %s154 = sphi 0, %s138
    $region4: #{ae_forward.1} parent=1 // loop_header_branch
      %17 = sbr.rel (%p15) target = $region8
    $region5: #{ae_forward.1} parent=1 // loop_body
      %s19 = ssub.s32 %s14, 1
      %s20 = ssub.s32 %s14, 2
      %s21 = sadd.s32 %s14, 1
      %s22 = ssub.s32 %s14, %s21
      %p23 = scmp.eq.s32.totalorder %s22, 0
      %s25 = sadd.s32 %s24, 1
      %s26 = scalar_select %p23, %s24, %s25
      %p29 = pneg %p23
      %p30 = scmp.eq.s32.totalorder %s14, 1
      %p31 = por %p29, %p30
      %p32 = scmp.ne.s32.totalorder %s24, %s27
      %p33 = scmp.eq.s32.totalorder %s14, 0
      %p34 = por %p32, %p33
      %p35 = scmp.ne.s32.totalorder %s24, %s27
      %p36 = scmp.eq.s32.totalorder %s19, 1
      %p37 = por %p35, %p36
      %p38 = scmp.ne.s32.totalorder %s27, %s28
      %p39 = scmp.eq.s32.totalorder %s19, 0
      %p40 = por %p38, %p39
      %p41 = scmp.ne.s32.totalorder %s27, %s28
      %p42 = scmp.eq.s32.totalorder %s20, 1
      %p43 = por %p41, %p42
      %p45 = scmp.ne.s32.totalorder %s28, %s44
      %p46 = scmp.eq.s32.totalorder %s20, 0
      %p47 = por %p45, %p46
      %s49 = sadd.s32 %s48, 1
      %p52 = scmp.eq.s32.totalorder %s14, 1
      %p53 = scmp.ne.s32.totalorder %s48, %s50
      %p54 = scmp.eq.s32.totalorder %s14, 0
      %p55 = por %p53, %p54
      %p56 = scmp.ne.s32.totalorder %s48, %s50
      %p57 = scmp.eq.s32.totalorder %s19, 1
      %p58 = por %p56, %p57
      %p59 = scmp.ne.s32.totalorder %s50, %s51
      %p60 = scmp.eq.s32.totalorder %s19, 0
      %p61 = por %p59, %p60
      %p62 = scmp.ne.s32.totalorder %s50, %s51
      %p63 = scmp.eq.s32.totalorder %s20, 1
      %p64 = por %p62, %p63
      %p66 = scmp.ne.s32.totalorder %s51, %s65
      %p67 = scmp.eq.s32.totalorder %s20, 0
      %p68 = por %p66, %p67
      %s70 = sadd.s32 %s69, 1
      %p73 = scmp.eq.s32.totalorder %s14, 1
      %p74 = scmp.ne.s32.totalorder %s69, %s71
      %p75 = scmp.eq.s32.totalorder %s14, 0
      %p76 = por %p74, %p75
      %p77 = scmp.ne.s32.totalorder %s69, %s71
      %p78 = scmp.eq.s32.totalorder %s19, 1
      %p79 = por %p77, %p78
      %p80 = scmp.ne.s32.totalorder %s71, %s72
      %p81 = scmp.eq.s32.totalorder %s19, 0
      %p82 = por %p80, %p81
      %p83 = scmp.ne.s32.totalorder %s71, %s72
      %p84 = scmp.eq.s32.totalorder %s20, 1
      %p85 = por %p83, %p84
      %p87 = scmp.ne.s32.totalorder %s72, %s86
      %p88 = scmp.eq.s32.totalorder %s20, 0
      %p89 = por %p87, %p88
      %s91 = sadd.s32 %s90, 1
      %p94 = scmp.eq.s32.totalorder %s14, 1
      %p95 = scmp.ne.s32.totalorder %s90, %s92
      %p96 = scmp.eq.s32.totalorder %s14, 0
      %p97 = por %p95, %p96
      %p98 = scmp.ne.s32.totalorder %s90, %s92
      %p99 = scmp.eq.s32.totalorder %s19, 1
      %p100 = por %p98, %p99
      %p101 = scmp.ne.s32.totalorder %s92, %s93
      %p102 = scmp.eq.s32.totalorder %s19, 0
      %p103 = por %p101, %p102
      %p104 = scmp.ne.s32.totalorder %s92, %s93
      %p105 = scmp.eq.s32.totalorder %s20, 1
      %p106 = por %p104, %p105
      %p108 = scmp.ne.s32.totalorder %s93, %s107
      %p109 = scmp.eq.s32.totalorder %s20, 0
      %p110 = por %p108, %p109
      %s112 = sadd.s32 %s111, 1
      %p115 = scmp.eq.s32.totalorder %s14, 1
      %p116 = scmp.ne.s32.totalorder %s111, %s113
      %p117 = scmp.eq.s32.totalorder %s14, 0
      %p118 = por %p116, %p117
      %p119 = scmp.ne.s32.totalorder %s111, %s113
      %p120 = scmp.eq.s32.totalorder %s19, 1
      %p121 = por %p119, %p120
      %p122 = scmp.ne.s32.totalorder %s113, %s114
      %p123 = scmp.eq.s32.totalorder %s19, 0
      %p124 = por %p122, %p123
      %p125 = scmp.ne.s32.totalorder %s113, %s114
      %p126 = scmp.eq.s32.totalorder %s20, 1
      %p127 = por %p125, %p126
      %p129 = scmp.ne.s32.totalorder %s114, %s128
      %p130 = scmp.eq.s32.totalorder %s20, 0
      %p131 = por %p129, %p130
      %s132 = ssub.s32 %s14, %s21
      %p133 = scmp.eq.s32.totalorder %s132, 0
      %s135 = sadd.s32 %s134, 1
      %s136 = scalar_select %p133, %s134, %s135
      %p139 = pneg %p133
      %p140 = scmp.eq.s32.totalorder %s14, 1
      %p141 = por %p139, %p140
      %p142 = scmp.ne.s32.totalorder %s134, %s137
      %p143 = scmp.eq.s32.totalorder %s14, 0
      %p144 = por %p142, %p143
      %p145 = scmp.ne.s32.totalorder %s134, %s137
      %p146 = scmp.eq.s32.totalorder %s19, 1
      %p147 = por %p145, %p146
      %p148 = scmp.ne.s32.totalorder %s137, %s138
      %p149 = scmp.eq.s32.totalorder %s19, 0
      %p150 = por %p148, %p149
      %p151 = scmp.ne.s32.totalorder %s137, %s138
      %p152 = scmp.eq.s32.totalorder %s20, 1
      %p153 = por %p151, %p152
      %p155 = scmp.ne.s32.totalorder %s138, %s154
      %p156 = scmp.eq.s32.totalorder %s20, 0
      %p157 = por %p155, %p156
      %p158 = scmp.le.s32.totalorder 1, %s14
      %p159 = scmp.lt.s32.totalorder %s14, 3
      %p160 = pnand %p158, %p159
      %p161 = pneg %p160
      // Predicated region
      $region9: #{ae_forward.1} parent=5 // pred_check
        _
      $region10: #{ae_forward.1} parent=5 // pred_check_branch
        %163 = sbr.rel (%p160) target = $region12
      $region11: #{ae_forward.1} parent=5 // pred_region
        %s164 = ssub.s32 %s14, 1
        // Predicated region
        $region13: #{ae_forward.1} parent=11 // pred_check
          %p165 = pneg %p61
        $region14: #{ae_forward.1} parent=11 // pred_check_branch
          %167 = sbr.rel (%p165) target = $region16
        $region15: #{ae_forward.1} parent=11 // pred_region
          _
        $region16: #{ae_forward.1} parent=11 // pred_fallthru
          _
        // Predicated region
        $region17: #{ae_forward.1} parent=11 // pred_check
          %p168 = pneg %p82
        $region18: #{ae_forward.1} parent=11 // pred_check_branch
          %170 = sbr.rel (%p168) target = $region20
        $region19: #{ae_forward.1} parent=11 // pred_region
          _
        $region20: #{ae_forward.1} parent=11 // pred_fallthru
          _
        // Predicated region
        $region21: #{ae_forward.1} parent=11 // pred_check
          %p171 = pneg %p103
        $region22: #{ae_forward.1} parent=11 // pred_check_branch
          %173 = sbr.rel (%p171) target = $region24
        $region23: #{ae_forward.1} parent=11 // pred_region
          _
        $region24: #{ae_forward.1} parent=11 // pred_fallthru
          _
        // Predicated region
        $region25: #{ae_forward.1} parent=11 // pred_check
          %p174 = pneg %p124
        $region26: #{ae_forward.1} parent=11 // pred_check_branch
          %176 = sbr.rel (%p174) target = $region28
        $region27: #{ae_forward.1} parent=11 // pred_region
          _
        $region28: #{ae_forward.1} parent=11 // pred_fallthru
          _
      $region12: #{ae_forward.1} parent=5 // pred_fallthru
        _
      %p177 = scmp.lt.s32.totalorder %s14, 2
      // Predicated region
      $region29: #{ae_forward.1} parent=5 // pred_check
        %p178 = pneg %p177
      $region30: #{ae_forward.1} parent=5 // pred_check_branch
        %180 = sbr.rel (%p178) target = $region32
      $region31: #{ae_forward.1} parent=5 // pred_region
        // Predicated region
        $region33: #{ae_forward.1} parent=31 // pred_check
          %p181 = pneg %p34
        $region34: #{ae_forward.1} parent=31 // pred_check_branch
          %183 = sbr.rel (%p181) target = $region36
        $region35: #{ae_forward.1} parent=31 // pred_region
          %s184 = smul.u32 16, %s14
          %p185 = scmp.lt.s32.totalorder %s184, 31
          %s186 = scalar_select %p185, %s184, 31
          %s187 = smul.addr %s186, 2
          %s188 = smul.addr %s187, 4
          %s189 = scalar_lea.vmem %s0, %s188
          %s190 = smul.u32 16, %s14
        $region36: #{ae_forward.1} parent=31 // pred_fallthru
          _
      $region32: #{ae_forward.1} parent=5 // pred_fallthru
        _
      %p191 = scmp.le.s32.totalorder 1, %s14
      %p192 = scmp.lt.s32.totalorder %s14, 3
      %p193 = pnand %p191, %p192
      %p194 = pneg %p193
      // Predicated region
      $region37: #{ae_forward.1} parent=5 // pred_check
        _
      $region38: #{ae_forward.1} parent=5 // pred_check_branch
        %196 = sbr.rel (%p193) target = $region40
      $region39: #{ae_forward.1} parent=5 // pred_region
        %s197 = ssub.s32 %s14, 1
        %s198 = smul.u32 16, %s19
        %p199 = scmp.lt.s32.totalorder %s198, 31
        %s200 = scalar_select %p199, %s198, 31
        %s201 = smul.addr %s200, 2
        %s202 = smul.addr %s201, 4
        %s203 = scalar_lea.vmem %s0, %s202
        %p204 = pneg %p40
        %p205 = pneg %p37
        %p206 = pneg %p61
        %p207 = pneg %p58
        %p208 = pneg %p82
        %p209 = pneg %p79
        %p210 = pneg %p103
        %p211 = pneg %p100
        %p212 = pneg %p124
        %p213 = pneg %p121
        %p214 = pneg %p150
        %p215 = pneg %p147
        %s216 = sand.u32 %s137, 1
        %s217 = scalar_lea.sflag [#allocation3], %s216
        %s218 = sand.u32 %s137, 1
        %s219 = smul.addr %s218, 256
        %s220 = scalar_lea.vmem [#allocation2], %s219
        %s221 = smul.u32 16, %s19
        %p222 = scmp.lt.s32.totalorder %s221, 31
        %s223 = scalar_select %p222, %s221, 31
        %s224 = smul.addr %s223, 2
        %s225 = smul.addr %s224, 4
        %s226 = scalar_lea.vmem %s0, %s225
        %s227 = smul.u32 16, %s19
        %s228 = smul.u32 16, %s19
        %v229 = vld [vmem:[%s226] sm:$0xff]
        %v230 = vld [vmem:[%s226 + $0x8] sm:$0xff]
        %v231 = vld [vmem:[%s226 + $0x10] sm:$0xff]
        %v232 = vld [vmem:[%s226 + $0x18] sm:$0xff]
        %v233 = vld [vmem:[%s226 + $0x20] sm:$0xff]
        %v234 = vld [vmem:[%s226 + $0x28] sm:$0xff]
        %v235 = vld [vmem:[%s226 + $0x30] sm:$0xff]
        %v236 = vld [vmem:[%s226 + $0x38] sm:$0xff]
        %v237 = vld [vmem:[%s226 + $0x40] sm:$0xff]
        %v238 = vld [vmem:[%s226 + $0x48] sm:$0xff]
        %v239 = vld [vmem:[%s226 + $0x50] sm:$0xff]
        %v240 = vld [vmem:[%s226 + $0x58] sm:$0xff]
        %v241 = vld [vmem:[%s226 + $0x60] sm:$0xff]
        %v242 = vld [vmem:[%s226 + $0x68] sm:$0xff]
        %v243 = vld [vmem:[%s226 + $0x70] sm:$0xff]
        %v244 = vld [vmem:[%s226 + $0x78] sm:$0xff]
        %v245 = vld [vmem:[%s1] sm:$0xf]
        %v246 = vld [vmem:[%s1 + $0x4] sm:$0xf]
        %v247 = vld [vmem:[%s1 + $0x8] sm:$0xf]
        %v248 = vld [vmem:[%s1 + $0xc] sm:$0xf]
        %v249 = vld [vmem:[%s1 + $0x10] sm:$0xf]
        %v250 = vld [vmem:[%s1 + $0x14] sm:$0xf]
        %v251 = vld [vmem:[%s1 + $0x18] sm:$0xf]
        %v252 = vld [vmem:[%s1 + $0x1c] sm:$0xf]
        %v253 = vld [vmem:[%s1 + $0x20] sm:$0xf]
        %v254 = vld [vmem:[%s1 + $0x24] sm:$0xf]
        %v255 = vld [vmem:[%s1 + $0x28] sm:$0xf]
        %v256 = vld [vmem:[%s1 + $0x2c] sm:$0xf]
        %v257 = vld [vmem:[%s1 + $0x30] sm:$0xf]
        %v258 = vld [vmem:[%s1 + $0x34] sm:$0xf]
        %v259 = vld [vmem:[%s1 + $0x38] sm:$0xf]
        %v260 = vld [vmem:[%s1 + $0x3c] sm:$0xf]
        %v261 = vld [vmem:[%s1 + $0x40] sm:$0xf]
        %v262 = vld [vmem:[%s1 + $0x44] sm:$0xf]
        %v263 = vld [vmem:[%s1 + $0x48] sm:$0xf]
        %v264 = vld [vmem:[%s1 + $0x4c] sm:$0xf]
        %v265 = vld [vmem:[%s1 + $0x50] sm:$0xf]
        %v266 = vld [vmem:[%s1 + $0x54] sm:$0xf]
        %v267 = vld [vmem:[%s1 + $0x58] sm:$0xf]
        %v268 = vld [vmem:[%s1 + $0x5c] sm:$0xf]
        %v269 = vld [vmem:[%s1 + $0x60] sm:$0xf]
        %v270 = vld [vmem:[%s1 + $0x64] sm:$0xf]
        %v271 = vld [vmem:[%s1 + $0x68] sm:$0xf]
        %v272 = vld [vmem:[%s1 + $0x6c] sm:$0xf]
        %v273 = vld [vmem:[%s1 + $0x70] sm:$0xf]
        %v274 = vld [vmem:[%s1 + $0x74] sm:$0xf]
        %v275 = vld [vmem:[%s1 + $0x78] sm:$0xf]
        %v276 = vld [vmem:[%s1 + $0x7c] sm:$0xf]
        %v277 = vld [vmem:[%s2] sm:$0x1]
        %v279 = vperm.slane %v277, 0
        %v297 = vunpack.c.l.b16 %v229
        %v298 = vunpack.c.h.b16 %v229
        %v299 = vunpack.c.l.b16 %v230
        %v300 = vunpack.c.h.b16 %v230
        %v301 = vunpack.c.l.b16 %v231
        %v302 = vunpack.c.h.b16 %v231
        %v303 = vunpack.c.l.b16 %v232
        %v304 = vunpack.c.h.b16 %v232
        %v305 = vunpack.c.l.b16 %v233
        %v306 = vunpack.c.h.b16 %v233
        %v307 = vunpack.c.l.b16 %v234
        %v308 = vunpack.c.h.b16 %v234
        %v309 = vunpack.c.l.b16 %v235
        %v310 = vunpack.c.h.b16 %v235
        %v311 = vunpack.c.l.b16 %v236
        %v312 = vunpack.c.h.b16 %v236
        %v313 = vunpack.c.l.b16 %v237
        %v314 = vunpack.c.h.b16 %v237
        %v315 = vunpack.c.l.b16 %v238
        %v316 = vunpack.c.h.b16 %v238
        %v317 = vunpack.c.l.b16 %v239
        %v318 = vunpack.c.h.b16 %v239
        %v319 = vunpack.c.l.b16 %v240
        %v320 = vunpack.c.h.b16 %v240
        %v321 = vunpack.c.l.b16 %v241
        %v322 = vunpack.c.h.b16 %v241
        %v323 = vunpack.c.l.b16 %v242
        %v324 = vunpack.c.h.b16 %v242
        %v325 = vunpack.c.l.b16 %v243
        %v326 = vunpack.c.h.b16 %v243
        %v327 = vunpack.c.l.b16 %v244
        %v328 = vunpack.c.h.b16 %v244
        %v329 = vpack.c.b16 %v299, %v297
        %v330 = vpack.c.b16 %v300, %v298
        %v331 = vpack.c.b16 %v303, %v301
        %v332 = vpack.c.b16 %v304, %v302
        %v333 = vpack.c.b16 %v307, %v305
        %v334 = vpack.c.b16 %v308, %v306
        %v335 = vpack.c.b16 %v311, %v309
        %v336 = vpack.c.b16 %v312, %v310
        %v337 = vpack.c.b16 %v315, %v313
        %v338 = vpack.c.b16 %v316, %v314
        %v339 = vpack.c.b16 %v319, %v317
        %v340 = vpack.c.b16 %v320, %v318
        %v341 = vpack.c.b16 %v323, %v321
        %v342 = vpack.c.b16 %v324, %v322
        %v343 = vpack.c.b16 %v327, %v325
        %v344 = vpack.c.b16 %v328, %v326
        %v393 = vunpack.c.l.b16 %v245
        %v394 = vunpack.c.l.b16 %v246
        %v395 = vunpack.c.l.b16 %v247
        %v396 = vunpack.c.l.b16 %v248
        %v397 = vunpack.c.l.b16 %v249
        %v398 = vunpack.c.l.b16 %v250
        %v399 = vunpack.c.l.b16 %v251
        %v400 = vunpack.c.l.b16 %v252
        %v401 = vunpack.c.l.b16 %v253
        %v402 = vunpack.c.l.b16 %v254
        %v403 = vunpack.c.l.b16 %v255
        %v404 = vunpack.c.l.b16 %v256
        %v405 = vunpack.c.l.b16 %v257
        %v406 = vunpack.c.l.b16 %v258
        %v407 = vunpack.c.l.b16 %v259
        %v408 = vunpack.c.l.b16 %v260
        %v409 = vunpack.c.l.b16 %v261
        %v410 = vunpack.c.l.b16 %v262
        %v411 = vunpack.c.l.b16 %v263
        %v412 = vunpack.c.l.b16 %v264
        %v413 = vunpack.c.l.b16 %v265
        %v414 = vunpack.c.l.b16 %v266
        %v415 = vunpack.c.l.b16 %v267
        %v416 = vunpack.c.l.b16 %v268
        %v417 = vunpack.c.l.b16 %v269
        %v418 = vunpack.c.l.b16 %v270
        %v419 = vunpack.c.l.b16 %v271
        %v420 = vunpack.c.l.b16 %v272
        %v421 = vunpack.c.l.b16 %v273
        %v422 = vunpack.c.l.b16 %v274
        %v423 = vunpack.c.l.b16 %v275
        %v424 = vunpack.c.l.b16 %v276
        %v425 = vpack.c.b16 %v394, %v393
        %v426 = vpack.c.b16 %v396, %v395
        %v427 = vpack.c.b16 %v398, %v397
        %v428 = vpack.c.b16 %v400, %v399
        %v429 = vpack.c.b16 %v402, %v401
        %v430 = vpack.c.b16 %v404, %v403
        %v431 = vpack.c.b16 %v406, %v405
        %v432 = vpack.c.b16 %v408, %v407
        %v433 = vpack.c.b16 %v410, %v409
        %v434 = vpack.c.b16 %v412, %v411
        %v435 = vpack.c.b16 %v414, %v413
        %v436 = vpack.c.b16 %v416, %v415
        %v437 = vpack.c.b16 %v418, %v417
        %v438 = vpack.c.b16 %v420, %v419
        %v439 = vpack.c.b16 %v422, %v421
        %v440 = vpack.c.b16 %v424, %v423
        %457 = vmatpush.bf16.msra.mxu0 %v432
        %458 = vmatpush.bf16.msra.mxu0 %v431
        %459 = vmatpush.bf16.msra.mxu0 %v430
        %460 = vmatpush.bf16.msra.mxu0 %v429
        %461 = vmatpush.bf16.msra.mxu0 %v428
        %462 = vmatpush.bf16.msra.mxu0 %v427
        %463 = vmatpush.bf16.msra.mxu0 %v426
        %464 = vmatpush.bf16.msra.mxu0 %v425
        %465 = vmatmul.bf16.gmra.mxu0 %v329
        %v466 = vpop.f32.mrf.mxu0
        %v467 = vadd.f32 %v279, %v466
        %v468 = vpop.f32.mrf.mxu0
        %v469 = vadd.f32 %v279, %v468
        %470 = vmatmul.bf16.gmra.mxu0 %v331
        %v471 = vpop.f32.mrf.mxu0
        %v472 = vadd.f32 %v279, %v471
        %v473 = vpop.f32.mrf.mxu0
        %v474 = vadd.f32 %v279, %v473
        %475 = vmatmul.bf16.gmra.mxu0 %v333
        %v476 = vpop.f32.mrf.mxu0
        %v477 = vadd.f32 %v279, %v476
        %v478 = vpop.f32.mrf.mxu0
        %v479 = vadd.f32 %v279, %v478
        %480 = vmatmul.bf16.gmra.mxu0 %v335
        %v481 = vpop.f32.mrf.mxu0
        %v482 = vadd.f32 %v279, %v481
        %v483 = vpop.f32.mrf.mxu0
        %v484 = vadd.f32 %v279, %v483
        %485 = vmatmul.bf16.gmra.mxu0 %v337
        %v486 = vpop.f32.mrf.mxu0
        %v487 = vadd.f32 %v279, %v486
        %v488 = vpop.f32.mrf.mxu0
        %v489 = vadd.f32 %v279, %v488
        %490 = vmatmul.bf16.gmra.mxu0 %v339
        %v491 = vpop.f32.mrf.mxu0
        %v492 = vadd.f32 %v279, %v491
        %v493 = vpop.f32.mrf.mxu0
        %v494 = vadd.f32 %v279, %v493
        %495 = vmatmul.bf16.gmra.mxu0 %v341
        %v496 = vpop.f32.mrf.mxu0
        %v497 = vadd.f32 %v279, %v496
        %v498 = vpop.f32.mrf.mxu0
        %v499 = vadd.f32 %v279, %v498
        %500 = vmatmul.bf16.gmra.mxu0 %v343
        %v501 = vpop.f32.mrf.mxu0
        %v502 = vadd.f32 %v279, %v501
        %v503 = vpop.f32.mrf.mxu0
        %v504 = vadd.f32 %v279, %v503
        %505 = vdwg.mxu0
        %506 = vmatpush.bf16.msra.mxu0 %v440
        %507 = vmatpush.bf16.msra.mxu0 %v439
        %508 = vmatpush.bf16.msra.mxu0 %v438
        %509 = vmatpush.bf16.msra.mxu0 %v437
        %510 = vmatpush.bf16.msra.mxu0 %v436
        %511 = vmatpush.bf16.msra.mxu0 %v435
        %512 = vmatpush.bf16.msra.mxu0 %v434
        %513 = vmatpush.bf16.msra.mxu0 %v433
        %514 = vmatmul.bf16.gmra.mxu0 %v330
        %v515 = vpop.f32.mrf.mxu0
        %v516 = vadd.f32 %v467, %v515
        %v517 = vpop.f32.mrf.mxu0
        %v518 = vadd.f32 %v469, %v517
        %519 = vmatmul.bf16.gmra.mxu0 %v332
        %v520 = vpop.f32.mrf.mxu0
        %v521 = vadd.f32 %v472, %v520
        %v522 = vpop.f32.mrf.mxu0
        %v523 = vadd.f32 %v474, %v522
        %524 = vmatmul.bf16.gmra.mxu0 %v334
        %v525 = vpop.f32.mrf.mxu0
        %v526 = vadd.f32 %v477, %v525
        %v527 = vpop.f32.mrf.mxu0
        %v528 = vadd.f32 %v479, %v527
        %529 = vmatmul.bf16.gmra.mxu0 %v336
        %v530 = vpop.f32.mrf.mxu0
        %v531 = vadd.f32 %v482, %v530
        %v532 = vpop.f32.mrf.mxu0
        %v533 = vadd.f32 %v484, %v532
        %534 = vmatmul.bf16.gmra.mxu0 %v338
        %v535 = vpop.f32.mrf.mxu0
        %v536 = vadd.f32 %v487, %v535
        %v537 = vpop.f32.mrf.mxu0
        %v538 = vadd.f32 %v489, %v537
        %539 = vmatmul.bf16.gmra.mxu0 %v340
        %v540 = vpop.f32.mrf.mxu0
        %v541 = vadd.f32 %v492, %v540
        %v542 = vpop.f32.mrf.mxu0
        %v543 = vadd.f32 %v494, %v542
        %544 = vmatmul.bf16.gmra.mxu0 %v342
        %v545 = vpop.f32.mrf.mxu0
        %v546 = vadd.f32 %v497, %v545
        %v547 = vpop.f32.mrf.mxu0
        %v548 = vadd.f32 %v499, %v547
        %549 = vmatmul.bf16.gmra.mxu0 %v344
        %v550 = vpop.f32.mrf.mxu0
        %v551 = vadd.f32 %v502, %v550
        %v552 = vpop.f32.mrf.mxu0
        %v553 = vadd.f32 %v504, %v552
        %554 = vdwg.mxu0
        %v555 = vmax.f32 %v516, 0.0
        %v556 = vmax.f32 %v518, 0.0
        %v557 = vmax.f32 %v521, 0.0
        %v558 = vmax.f32 %v523, 0.0
        %v559 = vmax.f32 %v526, 0.0
        %v560 = vmax.f32 %v528, 0.0
        %v561 = vmax.f32 %v531, 0.0
        %v562 = vmax.f32 %v533, 0.0
        %v563 = vmax.f32 %v536, 0.0
        %v564 = vmax.f32 %v538, 0.0
        %v565 = vmax.f32 %v541, 0.0
        %v566 = vmax.f32 %v543, 0.0
        %v567 = vmax.f32 %v546, 0.0
        %v568 = vmax.f32 %v548, 0.0
        %v569 = vmax.f32 %v551, 0.0
        %v570 = vmax.f32 %v553, 0.0
        %v571 = vpack.c.bf16 %v556, %v555
        %v572 = vpack.c.bf16 %v558, %v557
        %v573 = vpack.c.bf16 %v560, %v559
        %v574 = vpack.c.bf16 %v562, %v561
        %v575 = vpack.c.bf16 %v564, %v563
        %v576 = vpack.c.bf16 %v566, %v565
        %v577 = vpack.c.bf16 %v568, %v567
        %v578 = vpack.c.bf16 %v570, %v569
        %v579 = vld [vmem:[%s3] sm:$0xff]
        %v580 = vld [vmem:[%s3 + $0x8] sm:$0xff]
        %v581 = vld [vmem:[%s3 + $0x10] sm:$0xff]
        %v582 = vld [vmem:[%s3 + $0x18] sm:$0xff]
        %v583 = vld [vmem:[%s3 + $0x20] sm:$0xff]
        %v584 = vld [vmem:[%s3 + $0x28] sm:$0xff]
        %v585 = vld [vmem:[%s3 + $0x30] sm:$0xff]
        %v586 = vld [vmem:[%s3 + $0x38] sm:$0xff]
        %v587 = vld [vmem:[%s3 + $0x40] sm:$0xff]
        %v588 = vld [vmem:[%s3 + $0x48] sm:$0xff]
        %v589 = vld [vmem:[%s3 + $0x50] sm:$0xff]
        %v590 = vld [vmem:[%s3 + $0x58] sm:$0xff]
        %v591 = vld [vmem:[%s3 + $0x60] sm:$0xff]
        %v592 = vld [vmem:[%s3 + $0x68] sm:$0xff]
        %v593 = vld [vmem:[%s3 + $0x70] sm:$0xff]
        %v594 = vld [vmem:[%s3 + $0x78] sm:$0xff]
        %v595 = vld [vmem:[%s4] sm:$0x3]
        %v597 = vperm.slane %v595, 0
        %v598 = vperm.slane %v595, 1
        %v617 = vunpack.c.l.b16 %v579
        %v618 = vunpack.c.h.b16 %v579
        %v619 = vunpack.c.l.b16 %v580
        %v620 = vunpack.c.h.b16 %v580
        %v621 = vunpack.c.l.b16 %v581
        %v622 = vunpack.c.h.b16 %v581
        %v623 = vunpack.c.l.b16 %v582
        %v624 = vunpack.c.h.b16 %v582
        %v625 = vunpack.c.l.b16 %v583
        %v626 = vunpack.c.h.b16 %v583
        %v627 = vunpack.c.l.b16 %v584
        %v628 = vunpack.c.h.b16 %v584
        %v629 = vunpack.c.l.b16 %v585
        %v630 = vunpack.c.h.b16 %v585
        %v631 = vunpack.c.l.b16 %v586
        %v632 = vunpack.c.h.b16 %v586
        %v633 = vunpack.c.l.b16 %v587
        %v634 = vunpack.c.h.b16 %v587
        %v635 = vunpack.c.l.b16 %v588
        %v636 = vunpack.c.h.b16 %v588
        %v637 = vunpack.c.l.b16 %v589
        %v638 = vunpack.c.h.b16 %v589
        %v639 = vunpack.c.l.b16 %v590
        %v640 = vunpack.c.h.b16 %v590
        %v641 = vunpack.c.l.b16 %v591
        %v642 = vunpack.c.h.b16 %v591
        %v643 = vunpack.c.l.b16 %v592
        %v644 = vunpack.c.h.b16 %v592
        %v645 = vunpack.c.l.b16 %v593
        %v646 = vunpack.c.h.b16 %v593
        %v647 = vunpack.c.l.b16 %v594
        %v648 = vunpack.c.h.b16 %v594
        %v649 = vpack.c.b16 %v619, %v617
        %v650 = vpack.c.b16 %v620, %v618
        %v651 = vpack.c.b16 %v623, %v621
        %v652 = vpack.c.b16 %v624, %v622
        %v653 = vpack.c.b16 %v627, %v625
        %v654 = vpack.c.b16 %v628, %v626
        %v655 = vpack.c.b16 %v631, %v629
        %v656 = vpack.c.b16 %v632, %v630
        %v657 = vpack.c.b16 %v635, %v633
        %v658 = vpack.c.b16 %v636, %v634
        %v659 = vpack.c.b16 %v639, %v637
        %v660 = vpack.c.b16 %v640, %v638
        %v661 = vpack.c.b16 %v643, %v641
        %v662 = vpack.c.b16 %v644, %v642
        %v663 = vpack.c.b16 %v647, %v645
        %v664 = vpack.c.b16 %v648, %v646
        %681 = vmatpush.bf16.msra.mxu0 %v663
        %682 = vmatpush.bf16.msra.mxu0 %v661
        %683 = vmatpush.bf16.msra.mxu0 %v659
        %684 = vmatpush.bf16.msra.mxu0 %v657
        %685 = vmatpush.bf16.msra.mxu0 %v655
        %686 = vmatpush.bf16.msra.mxu0 %v653
        %687 = vmatpush.bf16.msra.mxu0 %v651
        %688 = vmatpush.bf16.msra.mxu0 %v649
        %689 = vmatmul.bf16.gmra.mxu0 %v571
        %v690 = vpop.f32.mrf.mxu0
        %v691 = vadd.f32 %v597, %v690
        %v692 = vpop.f32.mrf.mxu0
        %v693 = vadd.f32 %v597, %v692
        %694 = vmatmul.bf16.gmra.mxu0 %v572
        %v695 = vpop.f32.mrf.mxu0
        %v696 = vadd.f32 %v597, %v695
        %v697 = vpop.f32.mrf.mxu0
        %v698 = vadd.f32 %v597, %v697
        %699 = vmatmul.bf16.gmra.mxu0 %v573
        %v700 = vpop.f32.mrf.mxu0
        %v701 = vadd.f32 %v597, %v700
        %v702 = vpop.f32.mrf.mxu0
        %v703 = vadd.f32 %v597, %v702
        %704 = vmatmul.bf16.gmra.mxu0 %v574
        %v705 = vpop.f32.mrf.mxu0
        %v706 = vadd.f32 %v597, %v705
        %v707 = vpop.f32.mrf.mxu0
        %v708 = vadd.f32 %v597, %v707
        %709 = vmatmul.bf16.gmra.mxu0 %v575
        %v710 = vpop.f32.mrf.mxu0
        %v711 = vadd.f32 %v597, %v710
        %v712 = vpop.f32.mrf.mxu0
        %v713 = vadd.f32 %v597, %v712
        %714 = vmatmul.bf16.gmra.mxu0 %v576
        %v715 = vpop.f32.mrf.mxu0
        %v716 = vadd.f32 %v597, %v715
        %v717 = vpop.f32.mrf.mxu0
        %v718 = vadd.f32 %v597, %v717
        %719 = vmatmul.bf16.gmra.mxu0 %v577
        %v720 = vpop.f32.mrf.mxu0
        %v721 = vadd.f32 %v597, %v720
        %v722 = vpop.f32.mrf.mxu0
        %v723 = vadd.f32 %v597, %v722
        %724 = vmatmul.bf16.gmra.mxu0 %v578
        %v725 = vpop.f32.mrf.mxu0
        %v726 = vadd.f32 %v597, %v725
        %v727 = vpop.f32.mrf.mxu0
        %v728 = vadd.f32 %v597, %v727
        %729 = vdwg.mxu0
        %730 = vmatpush.bf16.msra.mxu0 %v664
        %731 = vmatpush.bf16.msra.mxu0 %v662
        %732 = vmatpush.bf16.msra.mxu0 %v660
        %733 = vmatpush.bf16.msra.mxu0 %v658
        %734 = vmatpush.bf16.msra.mxu0 %v656
        %735 = vmatpush.bf16.msra.mxu0 %v654
        %736 = vmatpush.bf16.msra.mxu0 %v652
        %737 = vmatpush.bf16.msra.mxu0 %v650
        %738 = vmatmul.bf16.gmra.mxu0 %v571
        %v739 = vpop.f32.mrf.mxu0
        %v740 = vadd.f32 %v598, %v739
        %v741 = vpop.f32.mrf.mxu0
        %v742 = vadd.f32 %v598, %v741
        %743 = vmatmul.bf16.gmra.mxu0 %v572
        %v744 = vpop.f32.mrf.mxu0
        %v745 = vadd.f32 %v598, %v744
        %v746 = vpop.f32.mrf.mxu0
        %v747 = vadd.f32 %v598, %v746
        %748 = vmatmul.bf16.gmra.mxu0 %v573
        %v749 = vpop.f32.mrf.mxu0
        %v750 = vadd.f32 %v598, %v749
        %v751 = vpop.f32.mrf.mxu0
        %v752 = vadd.f32 %v598, %v751
        %753 = vmatmul.bf16.gmra.mxu0 %v574
        %v754 = vpop.f32.mrf.mxu0
        %v755 = vadd.f32 %v598, %v754
        %v756 = vpop.f32.mrf.mxu0
        %v757 = vadd.f32 %v598, %v756
        %758 = vmatmul.bf16.gmra.mxu0 %v575
        %v759 = vpop.f32.mrf.mxu0
        %v760 = vadd.f32 %v598, %v759
        %v761 = vpop.f32.mrf.mxu0
        %v762 = vadd.f32 %v598, %v761
        %763 = vmatmul.bf16.gmra.mxu0 %v576
        %v764 = vpop.f32.mrf.mxu0
        %v765 = vadd.f32 %v598, %v764
        %v766 = vpop.f32.mrf.mxu0
        %v767 = vadd.f32 %v598, %v766
        %768 = vmatmul.bf16.gmra.mxu0 %v577
        %v769 = vpop.f32.mrf.mxu0
        %v770 = vadd.f32 %v598, %v769
        %v771 = vpop.f32.mrf.mxu0
        %v772 = vadd.f32 %v598, %v771
        %773 = vmatmul.bf16.gmra.mxu0 %v578
        %v774 = vpop.f32.mrf.mxu0
        %v775 = vadd.f32 %v598, %v774
        %v776 = vpop.f32.mrf.mxu0
        %v777 = vadd.f32 %v598, %v776
        %778 = vdwg.mxu0
        %779 = vst [vmem:[%s220] sm:$0xff] %v691
        %780 = vst [vmem:[%s220 + $0x8] sm:$0xff] %v740
        %781 = vst [vmem:[%s220 + $0x10] sm:$0xff] %v693
        %782 = vst [vmem:[%s220 + $0x18] sm:$0xff] %v742
        %783 = vst [vmem:[%s220 + $0x20] sm:$0xff] %v696
        %784 = vst [vmem:[%s220 + $0x28] sm:$0xff] %v745
        %785 = vst [vmem:[%s220 + $0x30] sm:$0xff] %v698
        %786 = vst [vmem:[%s220 + $0x38] sm:$0xff] %v747
        %787 = vst [vmem:[%s220 + $0x40] sm:$0xff] %v701
        %788 = vst [vmem:[%s220 + $0x48] sm:$0xff] %v750
        %789 = vst [vmem:[%s220 + $0x50] sm:$0xff] %v703
        %790 = vst [vmem:[%s220 + $0x58] sm:$0xff] %v752
        %791 = vst [vmem:[%s220 + $0x60] sm:$0xff] %v706
        %792 = vst [vmem:[%s220 + $0x68] sm:$0xff] %v755
        %793 = vst [vmem:[%s220 + $0x70] sm:$0xff] %v708
        %794 = vst [vmem:[%s220 + $0x78] sm:$0xff] %v757
        %795 = vst [vmem:[%s220 + $0x80] sm:$0xff] %v711
        %796 = vst [vmem:[%s220 + $0x88] sm:$0xff] %v760
        %797 = vst [vmem:[%s220 + $0x90] sm:$0xff] %v713
        %798 = vst [vmem:[%s220 + $0x98] sm:$0xff] %v762
        %799 = vst [vmem:[%s220 + $0xa0] sm:$0xff] %v716
        %800 = vst [vmem:[%s220 + $0xa8] sm:$0xff] %v765
        %801 = vst [vmem:[%s220 + $0xb0] sm:$0xff] %v718
        %802 = vst [vmem:[%s220 + $0xb8] sm:$0xff] %v767
        %803 = vst [vmem:[%s220 + $0xc0] sm:$0xff] %v721
        %804 = vst [vmem:[%s220 + $0xc8] sm:$0xff] %v770
        %805 = vst [vmem:[%s220 + $0xd0] sm:$0xff] %v723
        %806 = vst [vmem:[%s220 + $0xd8] sm:$0xff] %v772
        %807 = vst [vmem:[%s220 + $0xe0] sm:$0xff] %v726
        %808 = vst [vmem:[%s220 + $0xe8] sm:$0xff] %v775
        %809 = vst [vmem:[%s220 + $0xf0] sm:$0xff] %v728
        %810 = vst [vmem:[%s220 + $0xf8] sm:$0xff] %v777
        %s811 = sand.u32 %s137, 1
        %s812 = scalar_lea.sflag [#allocation3], %s811
        %s813 = sand.u32 %s137, 1
        %s814 = smul.addr %s813, 256
        %s815 = scalar_lea.vmem [#allocation2], %s814
        // Predicated region
        $region41: #{ae_forward.1} parent=39 // pred_check
          %p816 = pneg %p147
        $region42: #{ae_forward.1} parent=39 // pred_check_branch
          %818 = sbr.rel (%p816) target = $region44
        $region43: #{ae_forward.1} parent=39 // pred_region
          %s819 = smul.u32 16, %s19
          %821 = vsyncadd %s812, 0
          %s822 = smul.addr %s819, 2
          %s823 = smul.addr %s822, 8
          %s824 = scalar_lea.hbm %s5, %s823
          %s825 = sshll.u32 %s815, 4
          %s826 = int_to_ptr.vmem [resolvable:$true] %s825
          %s827 = sshll.u32 %s824, 4
          %s828 = int_to_ptr.hbm [resolvable:$true] %s827
          %833 = dma.vmem_to_hbm [thread:$0]  %s826, 4096, %s828, %s812, 256, 256, 16
        $region44: #{ae_forward.1} parent=39 // pred_fallthru
          _
      $region40: #{ae_forward.1} parent=5 // pred_fallthru
        _
      %p834 = scmp.le.s32.totalorder 2, %s14
      // Predicated region
      $region45: #{ae_forward.1} parent=5 // pred_check
        %p835 = pneg %p834
      $region46: #{ae_forward.1} parent=5 // pred_check_branch
        %837 = sbr.rel (%p835) target = $region48
      $region47: #{ae_forward.1} parent=5 // pred_region
        %s838 = ssub.s32 %s14, 2
        // Predicated region
        $region49: #{ae_forward.1} parent=47 // pred_check
          %p839 = pneg %p153
        $region50: #{ae_forward.1} parent=47 // pred_check_branch
          %841 = sbr.rel (%p839) target = $region52
        $region51: #{ae_forward.1} parent=47 // pred_region
          %s842 = sand.u32 %s138, 1
          %s843 = scalar_lea.sflag [#allocation3], %s842
          %s844 = sand.u32 %s138, 1
          %s845 = smul.addr %s844, 256
          %s846 = scalar_lea.vmem [#allocation2], %s845
          %848 = dma.done %s843, 4096
        $region52: #{ae_forward.1} parent=47 // pred_fallthru
          _
      $region48: #{ae_forward.1} parent=5 // pred_fallthru
        _
    $region6: #{ae_forward.1} parent=1 // loop_footer
      %s18 = sadd.s32 1, %s14
    $region7: #{ae_forward.1} parent=1 // loop_footer_branch
      %13 = sbr.rel target = $region3
    $region8: #{ae_forward.1} parent=1 // loop_exit
      _
    %849 = vsyncpa [#allocation3], 1
    %s850 = scalar_lea.sflag [#allocation3], 1
    %851 = vsyncpa %s850, 1

</llo_original>
